<compile_context>
chip_gen: v7x
topology: tpu7x:2x2x1
jax: 0.10.0
libtpu: 0.0.40
codegen_flags: <defaults>
</compile_context>

<pallas_src>
import functools
import math

import jax
import jax.numpy as jnp
from jax.experimental import pallas as pl
from jax.experimental.pallas import tpu as pltpu


def _round_up(x, m):
    return ((x + m - 1) // m) * m


def _cdiv(a, b):
    return -(-a // b)


def _tpu_resources():
    """(vmem_capacity_bytes, tensorcores_per_chip) with conservative fallbacks."""
    vmem_cap = 64 * 1024 * 1024          # conservative default (v7x per-TC)
    ncores = 1
    try:
        info = pltpu.get_tpu_info()
        vmem_cap = int(getattr(info, "vmem_capacity_bytes", vmem_cap))
    except Exception:
        pass
    try:
        kind = jax.devices()[0].device_kind.lower()
        if "v7" in kind or "7x" in kind:
            ncores = 2                   # only v7x has 2 TensorCores per chip
    except Exception:
        pass
    return vmem_cap, ncores


def _lsd_body(pred_ref, true_ref, sel_ref, out_ref, acc_ref, *, g, tile_rows, r2):
    c = pl.program_id(0)                 # core-split axis
    i = pl.program_id(1)                 # streaming axis ("arbitrary")
    inner = pl.num_programs(1)

    @pl.when(i == 0)
    def _():
        acc_ref[...] = jnp.zeros_like(acc_ref)

    diff = true_ref[...].astype(jnp.float32) - pred_ref[...].astype(jnp.float32)
    d2 = diff * diff                                          # (tile_rows, W)

    if g == 1:
        # Natural layout: reduce over the (full) last dim.
        row_sq = jnp.sum(d2, axis=1, keepdims=True)           # (tile_rows, 1)
    else:
        # Lane-folded layout: each W=128k-lane row holds g original rows of
        # length t.  Recover per-original-row sums with a resident 0/1
        # block-diagonal matmul (MXU); precision pinned so the f32 path keeps
        # full accuracy.
        row_sq = jnp.dot(d2, sel_ref[...],
                         preferred_element_type=jnp.float32,
                         precision=jax.lax.Precision.HIGHEST)  # (tile_rows, g)

    row_sqrt = jnp.sqrt(row_sq)

    blk = c * inner + i                                       # logical block index
    full = (blk + 1) * tile_rows <= r2                        # interior block?

    @pl.when(full)
    def _():
        # No masking on interior blocks; fold all sublanes before accumulating.
        acc_ref[...] += jnp.sum(row_sqrt, axis=0, keepdims=True)

    @pl.when(jnp.logical_not(full))
    def _():
        # Tail / clamped-duplicate block: mask by folded-row index only.
        # Mask is applied AFTER the sqrt, so garbage in padded rows (NaN/inf)
        # never reaches the accumulator.
        fold = blk * tile_rows + jax.lax.broadcasted_iota(
            jnp.int32, row_sqrt.shape, 0)
        masked = jnp.where(fold < r2, row_sqrt, 0.0)
        acc_ref[...] += jnp.sum(masked, axis=0, keepdims=True)

    @pl.when(i == inner - 1)
    def _():
        # Single final reduce per core; broadcast the scalar across a
        # lane-dense (8, 128) output block (unmasked store).
        out_ref[...] = jnp.zeros_like(out_ref) + jnp.sum(acc_ref[...])


def lsd_loss(y_pred, y_true, *, vmem_budget_bytes=None):
    assert y_pred.shape == y_true.shape
    B, C, F, T = y_pred.shape
    R = B * C * F

    vmem_cap, ncores = _tpu_resources()

    # Generalized lane fold: smallest k with (k*T) % 128 == 0 and R % k == 0.
    g = 1
    for k in range(1, 129):
        if (k * T) % 128 == 0 and R % k == 0 and k * T <= 2048:
            g = k
            break
    W = g * T
    R2 = R // g                           # folded row count

    pred2d = y_pred.reshape(R2, W)        # contiguous reshape: no data movement
    true2d = y_true.reshape(R2, W)

    itemsize = jnp.dtype(y_pred.dtype).itemsize
    sub = {1: 32, 2: 16}.get(itemsize, 8)  # sublane multiple per packing
    padded_W = _round_up(W, 128)

    if vmem_budget_bytes is None:
        # Streaming-input budget (already counts both inputs x double buffer).
        vmem_budget_bytes = int(vmem_cap * 0.65)

    bytes_per_row = 2 * 2 * padded_W * itemsize   # 2 inputs x 2 pipeline buffers
    tile_rows = max(sub, (vmem_budget_bytes // bytes_per_row) // sub * sub)
    tile_rows = min(tile_rows, _round_up(_cdiv(R2, ncores), sub))
    # TODO(synk): also tile the T/W axis if a single (sub, W) block exceeds VMEM.

    nblocks = _cdiv(R2, tile_rows)
    inner = _cdiv(nblocks, ncores)

    def in_map(c, i):
        blk = c * inner + i
        # Clamp fully-out-of-range blocks (odd nblocks on a 2-core split) to a
        # valid block; their contribution is zeroed by the in-kernel row mask.
        return (jnp.minimum(blk, nblocks - 1), 0)

    in_specs = [pl.BlockSpec((tile_rows, W), in_map),
                pl.BlockSpec((tile_rows, W), in_map)]
    inputs = [pred2d, true2d]

    if g > 1:
        # Selection matrix built once on the host side; resident block in VMEM.
        sel = (jnp.arange(W, dtype=jnp.int32)[:, None] // T
               == jnp.arange(g, dtype=jnp.int32)[None, :]).astype(jnp.float32)
        in_specs.append(pl.BlockSpec((W, g), lambda c, i: (0, 0)))
        inputs.append(sel)

        def kernel(pred_ref, true_ref, sel_ref, out_ref, acc_ref):
            _lsd_body(pred_ref, true_ref, sel_ref, out_ref, acc_ref,
                      g=g, tile_rows=tile_rows, r2=R2)
    else:
        def kernel(pred_ref, true_ref, out_ref, acc_ref):
            _lsd_body(pred_ref, true_ref, None, out_ref, acc_ref,
                      g=g, tile_rows=tile_rows, r2=R2)

    # vmem_limit derived from the actual allocation, clamped under capacity.
    alloc = 2 * 2 * tile_rows * padded_W * itemsize          # input tiles
    if g > 1:
        alloc += 2 * W * 128 * 4                             # resident sel (padded)
    alloc += 2 * 8 * 128 * 4                                 # output block buffers
    alloc += 8 * 128 * 4                                     # (1, g) acc scratch (padded)
    vmem_limit = max(16 * 1024 * 1024, alloc + 4 * 1024 * 1024)
    vmem_limit = min(vmem_limit, vmem_cap - 4 * 1024 * 1024)

    if ncores > 1:
        dims = (getattr(pltpu, "CORE_PARALLEL", "parallel"),
                getattr(pltpu, "ARBITRARY", "arbitrary"))
    else:
        dims = ("arbitrary", "arbitrary")

    out = pl.pallas_call(
        kernel,
        out_shape=jax.ShapeDtypeStruct((ncores * 8, 128), jnp.float32),
        grid_spec=pltpu.PrefetchScalarGridSpec(
            num_scalar_prefetch=0,
            grid=(ncores, inner),
            in_specs=in_specs,
            out_specs=pl.BlockSpec((8, 128), lambda c, i: (c, 0)),
            scratch_shapes=[pltpu.VMEM((1, g), jnp.float32)],
        ),
        compiler_params=pltpu.CompilerParams(
            dimension_semantics=dims,
            vmem_limit_bytes=int(vmem_limit),
        ),
        cost_estimate=pl.CostEstimate(
            flops=3 * R * T,
            transcendentals=R,
            bytes_accessed=2 * R * T * itemsize + ncores * 8 * 128 * 4,
        ),
    )(*inputs)

    partials = out.reshape(ncores, 8, 128)[:, 0, 0]   # one scalar partial per core
    # Hoisted normalization: the three nested means collapse to 1 / (R * sqrt(T)).
    return jnp.sum(partials) / jnp.float32(R * math.sqrt(T))


def lsd_loss_ref(y_pred, y_true):
    squared_diff = jnp.mean((y_true - y_pred) ** 2, axis=3)
    lsd = jnp.mean(jnp.sqrt(squared_diff), axis=2)
    return jnp.mean(lsd)


if __name__ == "__main__":
    key = jax.random.PRNGKey(0)
    k1, k2 = jax.random.split(key)
    B, C, F, T = 2, 4, 16, 16
    y_pred = jax.random.normal(k1, (B, C, F, T), dtype=jnp.float32)
    y_true = jax.random.normal(k2, (B, C, F, T), dtype=jnp.float32)

    out = jax.block_until_ready(lsd_loss(y_pred, y_true))
    ref = jax.block_until_ready(lsd_loss_ref(y_pred, y_true))
    assert jnp.allclose(out, ref, rtol=1e-5, atol=1e-5), (out, ref)
    print("KERNEL_OK")
</pallas_src>

<mosaic_0001>
module attributes {stable_mosaic.version = 11 : i64} {
  func.func @kernel(%arg0: i32, %arg1: i32, %arg2: memref<16x128xf32, #tpu.memory_space<vmem>>, %arg3: memref<16x128xf32, #tpu.memory_space<vmem>>, %arg4: memref<128x8xf32, #tpu.memory_space<vmem>>, %arg5: memref<8x128xf32, #tpu.memory_space<vmem>>, %arg6: memref<1x8xf32, #tpu.memory_space<vmem>>) attributes {dimension_semantics = [#tpu.dimension_semantics<arbitrary>, #tpu.dimension_semantics<arbitrary>], iteration_bounds = array<i64: 1, 1>, scalar_prefetch = 0 : i64, scratch_operands = 1 : i64, tpu.core_type = #tpu.core_type<tc>, window_params = [{transform_indices = @transform_0, window_bounds = array<i64: 16, 128>}, {transform_indices = @transform_1, window_bounds = array<i64: 16, 128>}, {pipeline_mode = #tpu.pipeline_mode<synchronous>, transform_indices = @transform_2, window_bounds = array<i64: 128, 8>}, {transform_indices = @transform_3, window_bounds = array<i64: 8, 128>}]} {
    %c0_i32 = arith.constant 0 : i32
    %0 = arith.cmpi eq, %arg1, %c0_i32 : i32
    %1 = arith.extui %0 : i1 to i32
    %c0_i32_0 = arith.constant 0 : i32
    %2 = arith.cmpi ne, %1, %c0_i32_0 : i32
    scf.if %2 {
      %cst_12 = arith.constant 0.000000e+00 : f32
      %23 = vector.broadcast %cst_12 : f32 to vector<1x8xf32>
      %c0_13 = arith.constant 0 : index
      %c0_14 = arith.constant 0 : index
      %24 = vector.load %arg6[%c0_13, %c0_14] : memref<1x8xf32, #tpu.memory_space<vmem>>, vector<1x8xf32>
      tpu.vector_store %arg6[%c0_13, %c0_14], %23 {strides = array<i32>} : memref<1x8xf32, #tpu.memory_space<vmem>>, vector<1x8xf32>,
    } else {
    }
    %c0 = arith.constant 0 : index
    %c0_1 = arith.constant 0 : index
    %3 = vector.load %arg3[%c0, %c0_1] : memref<16x128xf32, #tpu.memory_space<vmem>>, vector<16x128xf32>
    %c0_2 = arith.constant 0 : index
    %c0_3 = arith.constant 0 : index
    %4 = vector.load %arg2[%c0_2, %c0_3] : memref<16x128xf32, #tpu.memory_space<vmem>>, vector<16x128xf32>
    %5 = arith.subf %3, %4 : vector<16x128xf32>
    %6 = arith.mulf %5, %5 : vector<16x128xf32>
    %c0_4 = arith.constant 0 : index
    %c0_5 = arith.constant 0 : index
    %7 = vector.load %arg4[%c0_4, %c0_5] : memref<128x8xf32, #tpu.memory_space<vmem>>, vector<128x8xf32>
    %cst = arith.constant dense<0.000000e+00> : vector<16x8xf32>
    %8 = tpu.matmul %6, %7, %cst {dimension_numbers = #tpu.dot_dimension_numbers<[1], [0], [0], [1], [0, 0, 1, 1], [], []>, precision = #tpu.contract_precision<fp32>} : vector<16x128xf32>, vector<128x8xf32>, vector<16x8xf32> -> vector<16x8xf32>
    %9 = math.sqrt %8 : vector<16x8xf32>
    %c1_i32 = arith.constant 1 : i32
    %10 = arith.muli %arg0, %c1_i32 : i32
    %11 = arith.addi %10, %arg1 : i32
    %c1_i32_6 = arith.constant 1 : i32
    %12 = arith.addi %11, %c1_i32_6 : i32
    %c16_i32 = arith.constant 16 : i32
    %13 = arith.muli %12, %c16_i32 : i32
    %c16_i32_7 = arith.constant 16 : i32
    %14 = arith.cmpi sle, %13, %c16_i32_7 : i32
    %15 = arith.extui %14 : i1 to i32
    %c0_i32_8 = arith.constant 0 : i32
    %16 = arith.cmpi ne, %15, %c0_i32_8 : i32
    scf.if %16 {
      %c0_12 = arith.constant 0 : index
      %c0_13 = arith.constant 0 : index
      %23 = vector.load %arg6[%c0_12, %c0_13] : memref<1x8xf32, #tpu.memory_space<vmem>>, vector<1x8xf32>
      %cst_14 = arith.constant dense<0.000000e+00> : vector<8xf32>
      %24 = vector.multi_reduction <add>, %9, %cst_14 [0] : vector<16x8xf32> to vector<8xf32>
      %25 = vector.shape_cast %24 : vector<8xf32> to vector<1x8xf32>
      %26 = arith.addf %23, %25 : vector<1x8xf32>
      %c0_15 = arith.constant 0 : index
      %c0_16 = arith.constant 0 : index
      %27 = vector.load %arg6[%c0_15, %c0_16] : memref<1x8xf32, #tpu.memory_space<vmem>>, vector<1x8xf32>
      tpu.vector_store %arg6[%c0_15, %c0_16], %26 {strides = array<i32>} : memref<1x8xf32, #tpu.memory_space<vmem>>, vector<1x8xf32>,
    } else {
    }
    %true = arith.constant true
    %17 = arith.xori %14, %true : i1
    %18 = arith.extui %17 : i1 to i32
    %c0_i32_9 = arith.constant 0 : i32
    %19 = arith.cmpi ne, %18, %c0_i32_9 : i32
    scf.if %19 {
      %c16_i32_12 = arith.constant 16 : i32
      %23 = arith.muli %11, %c16_i32_12 : i32
      %24 = tpu.iota {dimensions = array<i32: 0>} : vector<16x8xi32>
      %25 = vector.broadcast %23 : i32 to vector<16x8xi32>
      %26 = arith.addi %25, %24 : vector<16x8xi32>
      %c16_i32_13 = arith.constant 16 : i32
      %27 = vector.broadcast %c16_i32_13 : i32 to vector<16x8xi32>
      %28 = arith.cmpi slt, %26, %27 : vector<16x8xi32>
      %cst_14 = arith.constant 0.000000e+00 : f32
      %29 = vector.broadcast %cst_14 : f32 to vector<16x8xf32>
      %30 = arith.select %28, %9, %29 : vector<16x8xi1>, vector<16x8xf32>
      %c0_15 = arith.constant 0 : index
      %c0_16 = arith.constant 0 : index
      %31 = vector.load %arg6[%c0_15, %c0_16] : memref<1x8xf32, #tpu.memory_space<vmem>>, vector<1x8xf32>
      %cst_17 = arith.constant dense<0.000000e+00> : vector<8xf32>
      %32 = vector.multi_reduction <add>, %30, %cst_17 [0] : vector<16x8xf32> to vector<8xf32>
      %33 = vector.shape_cast %32 : vector<8xf32> to vector<1x8xf32>
      %34 = arith.addf %31, %33 : vector<1x8xf32>
      %c0_18 = arith.constant 0 : index
      %c0_19 = arith.constant 0 : index
      %35 = vector.load %arg6[%c0_18, %c0_19] : memref<1x8xf32, #tpu.memory_space<vmem>>, vector<1x8xf32>
      tpu.vector_store %arg6[%c0_18, %c0_19], %34 {strides = array<i32>} : memref<1x8xf32, #tpu.memory_space<vmem>>, vector<1x8xf32>,
    } else {
    }
    %c0_i32_10 = arith.constant 0 : i32
    %20 = arith.cmpi eq, %arg1, %c0_i32_10 : i32
    %21 = arith.extui %20 : i1 to i32
    %c0_i32_11 = arith.constant 0 : i32
    %22 = arith.cmpi ne, %21, %c0_i32_11 : i32
    scf.if %22 {
      %cst_12 = arith.constant 0.000000e+00 : f32
      %23 = vector.broadcast %cst_12 : f32 to vector<8x128xf32>
      %c0_13 = arith.constant 0 : index
      %c0_14 = arith.constant 0 : index
      %24 = vector.load %arg6[%c0_13, %c0_14] : memref<1x8xf32, #tpu.memory_space<vmem>>, vector<1x8xf32>
      %25 = vector.shape_cast %24 : vector<1x8xf32> to vector<1x1x8xf32>
      %cst_15 = arith.constant dense<0.000000e+00> : vector<1xf32>
      %26 = vector.multi_reduction <add>, %25, %cst_15 [1, 2] : vector<1x1x8xf32> to vector<1xf32>
      %27 = vector.shape_cast %26 : vector<1xf32> to vector<1x1x1xf32>
      %28 = vector.extract %27[0, 0, 0] : f32 from vector<1x1x1xf32>
      %29 = vector.broadcast %28 : f32 to vector<8x128xf32>
      %30 = arith.addf %23, %29 : vector<8x128xf32>
      %c0_16 = arith.constant 0 : index
      %c0_17 = arith.constant 0 : index
      %31 = vector.load %arg5[%c0_16, %c0_17] : memref<8x128xf32, #tpu.memory_space<vmem>>, vector<8x128xf32>
      tpu.vector_store %arg5[%c0_16, %c0_17], %30 {strides = array<i32>} : memref<8x128xf32, #tpu.memory_space<vmem>>, vector<8x128xf32>,
    } else {
    }
    return
  }
  func.func @transform_0(%arg0: i32, %arg1: i32) -> (i32, i32) {
    %c1_i32 = arith.constant 1 : i32
    %0 = arith.muli %arg0, %c1_i32 : i32
    %1 = arith.addi %0, %arg1 : i32
    %c0_i32 = arith.constant 0 : i32
    %2 = arith.minsi %1, %c0_i32 : i32
    %c0_i32_0 = arith.constant 0 : i32
    %c0_i32_1 = arith.constant 0 : i32
    return %2, %c0_i32_0 : i32, i32
  }
  func.func @transform_1(%arg0: i32, %arg1: i32) -> (i32, i32) {
    %c1_i32 = arith.constant 1 : i32
    %0 = arith.muli %arg0, %c1_i32 : i32
    %1 = arith.addi %0, %arg1 : i32
    %c0_i32 = arith.constant 0 : i32
    %2 = arith.minsi %1, %c0_i32 : i32
    %c0_i32_0 = arith.constant 0 : i32
    %c0_i32_1 = arith.constant 0 : i32
    return %2, %c0_i32_0 : i32, i32
  }
  func.func @transform_2(%arg0: i32, %arg1: i32) -> (i32, i32) {
    %c0_i32 = arith.constant 0 : i32
    %c0_i32_0 = arith.constant 0 : i32
    %c0_i32_1 = arith.constant 0 : i32
    return %c0_i32, %c0_i32_0 : i32, i32
  }
  func.func @transform_3(%arg0: i32, %arg1: i32) -> (i32, i32) {
    %c0_i32 = arith.constant 0 : i32
    %c0_i32_0 = arith.constant 0 : i32
    return %arg0, %c0_i32 : i32, i32
  }
}

</mosaic_0001>

<llo_original>
// kernel: tpu_custom_call.1
$region0: #{tpu_custom_call.1}
  #allocation0 [shape = 'u32[]', space=smem, size = 0x4, offset = 0x4, fixed_abs, tag = 'smem constant byte address 0x4 - core index']
  #allocation1 [shape = 'u32[144,128]{1,0:T(1,128)}', space=vmem, size = 0x12000, scoped, tag = 'internal scratch']
  #allocation2 [shape = 'f32[1,8]{1,0:T(1,128)}', space=vmem, size = 0x200, scoped, tag = 'scratch operand']
  %s0 = inlined_call_operand.vmem [shape: f32[16,128], index: 0, kind: input, shape index: {}]
  %s1 = inlined_call_operand.vmem [shape: f32[16,128], index: 1, kind: input, shape index: {}]
  %s2 = inlined_call_operand.vmem [shape: f32[128,8], index: 2, kind: input, shape index: {}]
  %s3 = inlined_call_operand.hbm [shape: f32[8,128], index: 3, kind: output, shape index: {}]
  %s4 = sld [smem:[#allocation0]]
  $region38: #{tpu_custom_call.1} parent=0
    _
  %s6 = ssub.s32 1, %s4
  %s7 = scalar_select 0, %s6, %s4
  $region1: #{tpu_custom_call.1} parent=0
    #allocation3 [shape = 'u8[4096]{0}', space=vmem, size = 0x1000, scoped, tag = 'output window, operand 0, single buffered']
    #allocation4 [shape = 's32[1]{0}', space=sflag, size = 0x4, scoped, tag = 'scoped memory for tpu_custom_call.1']
    %8 = vsyncpa [#allocation4], 0
    // Predicated region
    $region2: #{tpu_custom_call.1} parent=1 // pred_check
      _
    $region3: #{tpu_custom_call.1} parent=1 // pred_check_branch
      %10 = sbr.rel (0) target = $region5
    $region4: #{tpu_custom_call.1} parent=1 // pred_region
      %s11 = sadd.s32 0, 0
      %p12 = scmp.lt.s32.totalorder %s11, 0
      %s13 = scalar_select %p12, %s11, 0
      %s14 = smul.u32 2, %s13
      %p15 = scmp.lt.s32.totalorder %s14, 1
      %s16 = scalar_select %p15, %s14, 1
      %s17 = smul.addr %s16, 8
      %s18 = scalar_lea.vmem %s0, %s17
      %s19 = sadd.s32 0, 0
      %p20 = scmp.lt.s32.totalorder %s19, 0
      %s21 = scalar_select %p20, %s19, 0
      %s22 = smul.u32 2, %s21
    $region5: #{tpu_custom_call.1} parent=1 // pred_fallthru
      _
    // Predicated region
    $region6: #{tpu_custom_call.1} parent=1 // pred_check
      _
    $region7: #{tpu_custom_call.1} parent=1 // pred_check_branch
      %24 = sbr.rel (0) target = $region9
    $region8: #{tpu_custom_call.1} parent=1 // pred_region
      %s25 = sadd.s32 0, 0
      %p26 = scmp.lt.s32.totalorder %s25, 0
      %s27 = scalar_select %p26, %s25, 0
      %s28 = smul.u32 2, %s27
      %p29 = scmp.lt.s32.totalorder %s28, 1
      %s30 = scalar_select %p29, %s28, 1
      %s31 = smul.addr %s30, 8
      %s32 = scalar_lea.vmem %s1, %s31
      %s33 = sadd.s32 0, 0
      %p34 = scmp.lt.s32.totalorder %s33, 0
      %s35 = scalar_select %p34, %s33, 0
      %s36 = smul.u32 2, %s35
    $region9: #{tpu_custom_call.1} parent=1 // pred_fallthru
      _
    // Predicated region
    $region10: #{tpu_custom_call.1} parent=1 // pred_check
      _
    $region11: #{tpu_custom_call.1} parent=1 // pred_check_branch
      %38 = sbr.rel (0) target = $region13
    $region12: #{tpu_custom_call.1} parent=1 // pred_region
      _
    $region13: #{tpu_custom_call.1} parent=1 // pred_fallthru
      _
    %s39 = sadd.s32 0, 0
    %p40 = scmp.lt.s32.totalorder %s39, 0
    %s41 = scalar_select %p40, %s39, 0
    %s42 = smul.u32 2, %s41
    %p43 = scmp.lt.s32.totalorder %s42, 1
    %s44 = scalar_select %p43, %s42, 1
    %s45 = smul.addr %s44, 8
    %s46 = scalar_lea.vmem %s0, %s45
    %s47 = sadd.s32 0, 0
    %p48 = scmp.lt.s32.totalorder %s47, 0
    %s49 = scalar_select %p48, %s47, 0
    %s50 = smul.u32 2, %s49
    %p51 = scmp.lt.s32.totalorder %s50, 1
    %s52 = scalar_select %p51, %s50, 1
    %s53 = smul.addr %s52, 8
    %s54 = scalar_lea.vmem %s1, %s53
    %s55 = sadd.s32 0, 0
    %p56 = scmp.lt.s32.totalorder %s55, 0
    %s57 = scalar_select %p56, %s55, 0
    %s58 = smul.u32 2, %s57
    %p59 = scmp.lt.s32.totalorder %s58, 1
    %s60 = scalar_select %p59, %s58, 1
    %s61 = smul.addr %s60, 8
    %s62 = scalar_lea.vmem %s0, %s61
    %s63 = sadd.s32 0, 0
    %p64 = scmp.lt.s32.totalorder %s63, 0
    %s65 = scalar_select %p64, %s63, 0
    %s66 = smul.u32 2, %s65
    %s67 = sadd.s32 0, 0
    %p68 = scmp.lt.s32.totalorder %s67, 0
    %s69 = scalar_select %p68, %s67, 0
    %s70 = smul.u32 2, %s69
    %p71 = scmp.lt.s32.totalorder %s70, 1
    %s72 = scalar_select %p71, %s70, 1
    %s73 = smul.addr %s72, 8
    %s74 = scalar_lea.vmem %s1, %s73
    %s75 = sadd.s32 0, 0
    %p76 = scmp.lt.s32.totalorder %s75, 0
    %s77 = scalar_select %p76, %s75, 0
    %s78 = smul.u32 2, %s77
    %p79 = scmp.eq.s32.totalorder 0, 0
    // Predicated region
    $region14: #{tpu_custom_call.1} parent=1 // pred_check
      %p80 = pneg %p79
    $region15: #{tpu_custom_call.1} parent=1 // pred_check_branch
      %82 = sbr.rel (%p80) target = $region17
    $region16: #{tpu_custom_call.1} parent=1 // pred_region
      %vm83 = vcmask 57344
      %84 = vst.msk [vmem:[#allocation2] sm:$0x1] %vm83, 0.0
    $region17: #{tpu_custom_call.1} parent=1 // pred_fallthru
      _
    %v85 = vld [vmem:[%s74] sm:$0xff]
    %v86 = vld [vmem:[%s74 + $0x8] sm:$0xff]
    %v87 = vld [vmem:[%s62] sm:$0xff]
    %v88 = vld [vmem:[%s62 + $0x8] sm:$0xff]
    %v89 = vsub.f32 %v85, %v87
    %v90 = vsub.f32 %v86, %v88
    %v91 = vmul.f32 %v89, %v89
    %v92 = vmul.f32 %v90, %v90
    %v93 = vld [vmem:[%s2] sm:$0xff]
    %v94 = vld [vmem:[%s2 + $0x8] sm:$0xff]
    %v95 = vld [vmem:[%s2 + $0x10] sm:$0xff]
    %v96 = vld [vmem:[%s2 + $0x18] sm:$0xff]
    %v97 = vld [vmem:[%s2 + $0x20] sm:$0xff]
    %v98 = vld [vmem:[%s2 + $0x28] sm:$0xff]
    %v99 = vld [vmem:[%s2 + $0x30] sm:$0xff]
    %v100 = vld [vmem:[%s2 + $0x38] sm:$0xff]
    %v101 = vld [vmem:[%s2 + $0x40] sm:$0xff]
    %v102 = vld [vmem:[%s2 + $0x48] sm:$0xff]
    %v103 = vld [vmem:[%s2 + $0x50] sm:$0xff]
    %v104 = vld [vmem:[%s2 + $0x58] sm:$0xff]
    %v105 = vld [vmem:[%s2 + $0x60] sm:$0xff]
    %v106 = vld [vmem:[%s2 + $0x68] sm:$0xff]
    %v107 = vld [vmem:[%s2 + $0x70] sm:$0xff]
    %v108 = vld [vmem:[%s2 + $0x78] sm:$0xff]
    %109 = vmatprep.subr.mxu0 0.0
    %v110 = vand.u32 %v93, 4294901760
    %111 = vmatpush1.msra.mxu0 %v110
    %112 = vmatprep.subr.mxu0 0.0
    %v113 = vand.u32 %v94, 4294901760
    %114 = vmatpush1.msra.mxu0 %v113
    %115 = vmatprep.subr.mxu0 0.0
    %v116 = vand.u32 %v95, 4294901760
    %117 = vmatpush1.msra.mxu0 %v116
    %118 = vmatprep.subr.mxu0 0.0
    %v119 = vand.u32 %v96, 4294901760
    %120 = vmatpush1.msra.mxu0 %v119
    %121 = vmatprep.subr.mxu0 0.0
    %v122 = vand.u32 %v97, 4294901760
    %123 = vmatpush1.msra.mxu0 %v122
    %124 = vmatprep.subr.mxu0 0.0
    %v125 = vand.u32 %v98, 4294901760
    %126 = vmatpush1.msra.mxu0 %v125
    %127 = vmatprep.subr.mxu0 0.0
    %v128 = vand.u32 %v99, 4294901760
    %129 = vmatpush1.msra.mxu0 %v128
    %130 = vmatprep.subr.mxu0 0.0
    %v131 = vand.u32 %v100, 4294901760
    %132 = vmatpush1.msra.mxu0 %v131
    %133 = vmatprep.subr.mxu0 0.0
    %v134 = vand.u32 %v101, 4294901760
    %135 = vmatpush1.msra.mxu0 %v134
    %136 = vmatprep.subr.mxu0 0.0
    %v137 = vand.u32 %v102, 4294901760
    %138 = vmatpush1.msra.mxu0 %v137
    %139 = vmatprep.subr.mxu0 0.0
    %v140 = vand.u32 %v103, 4294901760
    %141 = vmatpush1.msra.mxu0 %v140
    %142 = vmatprep.subr.mxu0 0.0
    %v143 = vand.u32 %v104, 4294901760
    %144 = vmatpush1.msra.mxu0 %v143
    %145 = vmatprep.subr.mxu0 0.0
    %v146 = vand.u32 %v105, 4294901760
    %147 = vmatpush1.msra.mxu0 %v146
    %148 = vmatprep.subr.mxu0 0.0
    %v149 = vand.u32 %v106, 4294901760
    %150 = vmatpush1.msra.mxu0 %v149
    %151 = vmatprep.subr.mxu0 0.0
    %v152 = vand.u32 %v107, 4294901760
    %153 = vmatpush1.msra.mxu0 %v152
    %154 = vmatprep.subr.mxu0 0.0
    %v155 = vand.u32 %v108, 4294901760
    %156 = vmatpush1.msra.mxu0 %v155
    %157 = vmatprep.subr.mxu0 0.0
    %158 = vmatpush1.msra.mxu0 0.0
    %159 = vmatprep.subr.mxu0 0.0
    %160 = vmatpush1.msra.mxu0 0.0
    %161 = vmatprep.subr.mxu0 0.0
    %162 = vmatpush1.msra.mxu0 0.0
    %163 = vmatprep.subr.mxu0 0.0
    %164 = vmatpush1.msra.mxu0 0.0
    %165 = vmatprep.subr.mxu0 0.0
    %166 = vmatpush1.msra.mxu0 0.0
    %167 = vmatprep.subr.mxu0 0.0
    %168 = vmatpush1.msra.mxu0 0.0
    %169 = vmatprep.subr.mxu0 0.0
    %170 = vmatpush1.msra.mxu0 0.0
    %171 = vmatprep.subr.mxu0 0.0
    %172 = vmatpush1.msra.mxu0 0.0
    %173 = vmatprep.subr.mxu0 0.0
    %174 = vmatpush1.msra.mxu0 0.0
    %175 = vmatprep.subr.mxu0 0.0
    %176 = vmatpush1.msra.mxu0 0.0
    %177 = vmatprep.subr.mxu0 0.0
    %178 = vmatpush1.msra.mxu0 0.0
    %179 = vmatprep.subr.mxu0 0.0
    %180 = vmatpush1.msra.mxu0 0.0
    %181 = vmatprep.subr.mxu0 0.0
    %182 = vmatpush1.msra.mxu0 0.0
    %183 = vmatprep.subr.mxu0 0.0
    %184 = vmatpush1.msra.mxu0 0.0
    %185 = vmatprep.subr.mxu0 0.0
    %186 = vmatpush1.msra.mxu0 0.0
    %187 = vmatprep.subr.mxu0 0.0
    %188 = vmatpush1.msra.mxu0 0.0
    %189 = vmatprep.mubr.f32.mxu0 0.0
    %v190 = vand.u32 %v91, 4294901760
    %v191 = vsub.f32 %v91, %v190
    %v192 = vand.u32 %v191, 4294901760
    %v193 = vsub.f32 %v191, %v192
    %v194 = vand.u32 %v193, 4294901760
    %195 = vmatmul.mubr.f32.gmra.mrb[0].mxu0 %v194
    %v196 = vpop.f32.mrb[0].mxu0
    %v197 = vadd.f32 0.0, %v196
    %v198 = vpop.f32.mrb[0].mxu0
    %199 = vmatprep.mubr.f32.mxu0 0.0
    %v200 = vand.u32 %v92, 4294901760
    %v201 = vsub.f32 %v92, %v200
    %v202 = vand.u32 %v201, 4294901760
    %v203 = vsub.f32 %v201, %v202
    %v204 = vand.u32 %v203, 4294901760
    %205 = vmatmul.mubr.f32.gmra.mrb[0].mxu0 %v204
    %v206 = vpop.f32.mrb[0].mxu0
    %v207 = vadd.f32 0.0, %v206
    %v208 = vpop.f32.mrb[0].mxu0
    %209 = vdwg.mxu0
    %210 = vmatprep.subr.mxu0 0.0
    %v211 = vand.u32 %v93, 4294901760
    %v212 = vsub.f32 %v93, %v211
    %v213 = vand.u32 %v212, 4294901760
    %v214 = vsub.f32 %v212, %v213
    %v215 = vand.u32 %v214, 4294901760
    %216 = vmatpush1.msra.mxu0 %v215
    %217 = vmatprep.subr.mxu0 0.0
    %v218 = vand.u32 %v94, 4294901760
    %v219 = vsub.f32 %v94, %v218
    %v220 = vand.u32 %v219, 4294901760
    %v221 = vsub.f32 %v219, %v220
    %v222 = vand.u32 %v221, 4294901760
    %223 = vmatpush1.msra.mxu0 %v222
    %224 = vmatprep.subr.mxu0 0.0
    %v225 = vand.u32 %v95, 4294901760
    %v226 = vsub.f32 %v95, %v225
    %v227 = vand.u32 %v226, 4294901760
    %v228 = vsub.f32 %v226, %v227
    %v229 = vand.u32 %v228, 4294901760
    %230 = vmatpush1.msra.mxu0 %v229
    %231 = vmatprep.subr.mxu0 0.0
    %v232 = vand.u32 %v96, 4294901760
    %v233 = vsub.f32 %v96, %v232
    %v234 = vand.u32 %v233, 4294901760
    %v235 = vsub.f32 %v233, %v234
    %v236 = vand.u32 %v235, 4294901760
    %237 = vmatpush1.msra.mxu0 %v236
    %238 = vmatprep.subr.mxu0 0.0
    %v239 = vand.u32 %v97, 4294901760
    %v240 = vsub.f32 %v97, %v239
    %v241 = vand.u32 %v240, 4294901760
    %v242 = vsub.f32 %v240, %v241
    %v243 = vand.u32 %v242, 4294901760
    %244 = vmatpush1.msra.mxu0 %v243
    %245 = vmatprep.subr.mxu0 0.0
    %v246 = vand.u32 %v98, 4294901760
    %v247 = vsub.f32 %v98, %v246
    %v248 = vand.u32 %v247, 4294901760
    %v249 = vsub.f32 %v247, %v248
    %v250 = vand.u32 %v249, 4294901760
    %251 = vmatpush1.msra.mxu0 %v250
    %252 = vmatprep.subr.mxu0 0.0
    %v253 = vand.u32 %v99, 4294901760
    %v254 = vsub.f32 %v99, %v253
    %v255 = vand.u32 %v254, 4294901760
    %v256 = vsub.f32 %v254, %v255
    %v257 = vand.u32 %v256, 4294901760
    %258 = vmatpush1.msra.mxu0 %v257
    %259 = vmatprep.subr.mxu0 0.0
    %v260 = vand.u32 %v100, 4294901760
    %v261 = vsub.f32 %v100, %v260
    %v262 = vand.u32 %v261, 4294901760
    %v263 = vsub.f32 %v261, %v262
    %v264 = vand.u32 %v263, 4294901760
    %265 = vmatpush1.msra.mxu0 %v264
    %266 = vmatprep.subr.mxu0 0.0
    %v267 = vand.u32 %v101, 4294901760
    %v268 = vsub.f32 %v101, %v267
    %v269 = vand.u32 %v268, 4294901760
    %v270 = vsub.f32 %v268, %v269
    %v271 = vand.u32 %v270, 4294901760
    %272 = vmatpush1.msra.mxu0 %v271
    %273 = vmatprep.subr.mxu0 0.0
    %v274 = vand.u32 %v102, 4294901760
    %v275 = vsub.f32 %v102, %v274
    %v276 = vand.u32 %v275, 4294901760
    %v277 = vsub.f32 %v275, %v276
    %v278 = vand.u32 %v277, 4294901760
    %279 = vmatpush1.msra.mxu0 %v278
    %280 = vmatprep.subr.mxu0 0.0
    %v281 = vand.u32 %v103, 4294901760
    %v282 = vsub.f32 %v103, %v281
    %v283 = vand.u32 %v282, 4294901760
    %v284 = vsub.f32 %v282, %v283
    %v285 = vand.u32 %v284, 4294901760
    %286 = vmatpush1.msra.mxu0 %v285
    %287 = vmatprep.subr.mxu0 0.0
    %v288 = vand.u32 %v104, 4294901760
    %v289 = vsub.f32 %v104, %v288
    %v290 = vand.u32 %v289, 4294901760
    %v291 = vsub.f32 %v289, %v290
    %v292 = vand.u32 %v291, 4294901760
    %293 = vmatpush1.msra.mxu0 %v292
    %294 = vmatprep.subr.mxu0 0.0
    %v295 = vand.u32 %v105, 4294901760
    %v296 = vsub.f32 %v105, %v295
    %v297 = vand.u32 %v296, 4294901760
    %v298 = vsub.f32 %v296, %v297
    %v299 = vand.u32 %v298, 4294901760
    %300 = vmatpush1.msra.mxu0 %v299
    %301 = vmatprep.subr.mxu0 0.0
    %v302 = vand.u32 %v106, 4294901760
    %v303 = vsub.f32 %v106, %v302
    %v304 = vand.u32 %v303, 4294901760
    %v305 = vsub.f32 %v303, %v304
    %v306 = vand.u32 %v305, 4294901760
    %307 = vmatpush1.msra.mxu0 %v306
    %308 = vmatprep.subr.mxu0 0.0
    %v309 = vand.u32 %v107, 4294901760
    %v310 = vsub.f32 %v107, %v309
    %v311 = vand.u32 %v310, 4294901760
    %v312 = vsub.f32 %v310, %v311
    %v313 = vand.u32 %v312, 4294901760
    %314 = vmatpush1.msra.mxu0 %v313
    %315 = vmatprep.subr.mxu0 0.0
    %v316 = vand.u32 %v108, 4294901760
    %v317 = vsub.f32 %v108, %v316
    %v318 = vand.u32 %v317, 4294901760
    %v319 = vsub.f32 %v317, %v318
    %v320 = vand.u32 %v319, 4294901760
    %321 = vmatpush1.msra.mxu0 %v320
    %322 = vmatprep.subr.mxu0 0.0
    %323 = vmatpush1.msra.mxu0 0.0
    %324 = vmatprep.subr.mxu0 0.0
    %325 = vmatpush1.msra.mxu0 0.0
    %326 = vmatprep.subr.mxu0 0.0
    %327 = vmatpush1.msra.mxu0 0.0
    %328 = vmatprep.subr.mxu0 0.0
    %329 = vmatpush1.msra.mxu0 0.0
    %330 = vmatprep.subr.mxu0 0.0
    %331 = vmatpush1.msra.mxu0 0.0
    %332 = vmatprep.subr.mxu0 0.0
    %333 = vmatpush1.msra.mxu0 0.0
    %334 = vmatprep.subr.mxu0 0.0
    %335 = vmatpush1.msra.mxu0 0.0
    %336 = vmatprep.subr.mxu0 0.0
    %337 = vmatpush1.msra.mxu0 0.0
    %338 = vmatprep.subr.mxu0 0.0
    %339 = vmatpush1.msra.mxu0 0.0
    %340 = vmatprep.subr.mxu0 0.0
    %341 = vmatpush1.msra.mxu0 0.0
    %342 = vmatprep.subr.mxu0 0.0
    %343 = vmatpush1.msra.mxu0 0.0
    %344 = vmatprep.subr.mxu0 0.0
    %345 = vmatpush1.msra.mxu0 0.0
    %346 = vmatprep.subr.mxu0 0.0
    %347 = vmatpush1.msra.mxu0 0.0
    %348 = vmatprep.subr.mxu0 0.0
    %349 = vmatpush1.msra.mxu0 0.0
    %350 = vmatprep.subr.mxu0 0.0
    %351 = vmatpush1.msra.mxu0 0.0
    %352 = vmatprep.subr.mxu0 0.0
    %353 = vmatpush1.msra.mxu0 0.0
    %354 = vmatprep.mubr.f32.mxu0 0.0
    %v355 = vand.u32 %v91, 4294901760
    %356 = vmatmul.mubr.f32.gmra.mrb[0].mxu0 %v355
    %v357 = vpop.f32.mrb[0].mxu0
    %v358 = vadd.f32 %v197, %v357
    %v359 = vpop.f32.mrb[0].mxu0
    %360 = vmatprep.mubr.f32.mxu0 0.0
    %v361 = vand.u32 %v92, 4294901760
    %362 = vmatmul.mubr.f32.gmra.mrb[0].mxu0 %v361
    %v363 = vpop.f32.mrb[0].mxu0
    %v364 = vadd.f32 %v207, %v363
    %v365 = vpop.f32.mrb[0].mxu0
    %366 = vdwg.mxu0
    %367 = vmatprep.subr.mxu0 0.0
    %v368 = vand.u32 %v93, 4294901760
    %v369 = vsub.f32 %v93, %v368
    %370 = vmatpush1.msra.mxu0 %v369
    %371 = vmatprep.subr.mxu0 0.0
    %v372 = vand.u32 %v94, 4294901760
    %v373 = vsub.f32 %v94, %v372
    %374 = vmatpush1.msra.mxu0 %v373
    %375 = vmatprep.subr.mxu0 0.0
    %v376 = vand.u32 %v95, 4294901760
    %v377 = vsub.f32 %v95, %v376
    %378 = vmatpush1.msra.mxu0 %v377
    %379 = vmatprep.subr.mxu0 0.0
    %v380 = vand.u32 %v96, 4294901760
    %v381 = vsub.f32 %v96, %v380
    %382 = vmatpush1.msra.mxu0 %v381
    %383 = vmatprep.subr.mxu0 0.0
    %v384 = vand.u32 %v97, 4294901760
    %v385 = vsub.f32 %v97, %v384
    %386 = vmatpush1.msra.mxu0 %v385
    %387 = vmatprep.subr.mxu0 0.0
    %v388 = vand.u32 %v98, 4294901760
    %v389 = vsub.f32 %v98, %v388
    %390 = vmatpush1.msra.mxu0 %v389
    %391 = vmatprep.subr.mxu0 0.0
    %v392 = vand.u32 %v99, 4294901760
    %v393 = vsub.f32 %v99, %v392
    %394 = vmatpush1.msra.mxu0 %v393
    %395 = vmatprep.subr.mxu0 0.0
    %v396 = vand.u32 %v100, 4294901760
    %v397 = vsub.f32 %v100, %v396
    %398 = vmatpush1.msra.mxu0 %v397
    %399 = vmatprep.subr.mxu0 0.0
    %v400 = vand.u32 %v101, 4294901760
    %v401 = vsub.f32 %v101, %v400
    %402 = vmatpush1.msra.mxu0 %v401
    %403 = vmatprep.subr.mxu0 0.0
    %v404 = vand.u32 %v102, 4294901760
    %v405 = vsub.f32 %v102, %v404
    %406 = vmatpush1.msra.mxu0 %v405
    %407 = vmatprep.subr.mxu0 0.0
    %v408 = vand.u32 %v103, 4294901760
    %v409 = vsub.f32 %v103, %v408
    %410 = vmatpush1.msra.mxu0 %v409
    %411 = vmatprep.subr.mxu0 0.0
    %v412 = vand.u32 %v104, 4294901760
    %v413 = vsub.f32 %v104, %v412
    %414 = vmatpush1.msra.mxu0 %v413
    %415 = vmatprep.subr.mxu0 0.0
    %v416 = vand.u32 %v105, 4294901760
    %v417 = vsub.f32 %v105, %v416
    %418 = vmatpush1.msra.mxu0 %v417
    %419 = vmatprep.subr.mxu0 0.0
    %v420 = vand.u32 %v106, 4294901760
    %v421 = vsub.f32 %v106, %v420
    %422 = vmatpush1.msra.mxu0 %v421
    %423 = vmatprep.subr.mxu0 0.0
    %v424 = vand.u32 %v107, 4294901760
    %v425 = vsub.f32 %v107, %v424
    %426 = vmatpush1.msra.mxu0 %v425
    %427 = vmatprep.subr.mxu0 0.0
    %v428 = vand.u32 %v108, 4294901760
    %v429 = vsub.f32 %v108, %v428
    %430 = vmatpush1.msra.mxu0 %v429
    %431 = vmatprep.subr.mxu0 0.0
    %432 = vmatpush1.msra.mxu0 0.0
    %433 = vmatprep.subr.mxu0 0.0
    %434 = vmatpush1.msra.mxu0 0.0
    %435 = vmatprep.subr.mxu0 0.0
    %436 = vmatpush1.msra.mxu0 0.0
    %437 = vmatprep.subr.mxu0 0.0
    %438 = vmatpush1.msra.mxu0 0.0
    %439 = vmatprep.subr.mxu0 0.0
    %440 = vmatpush1.msra.mxu0 0.0
    %441 = vmatprep.subr.mxu0 0.0
    %442 = vmatpush1.msra.mxu0 0.0
    %443 = vmatprep.subr.mxu0 0.0
    %444 = vmatpush1.msra.mxu0 0.0
    %445 = vmatprep.subr.mxu0 0.0
    %446 = vmatpush1.msra.mxu0 0.0
    %447 = vmatprep.subr.mxu0 0.0
    %448 = vmatpush1.msra.mxu0 0.0
    %449 = vmatprep.subr.mxu0 0.0
    %450 = vmatpush1.msra.mxu0 0.0
    %451 = vmatprep.subr.mxu0 0.0
    %452 = vmatpush1.msra.mxu0 0.0
    %453 = vmatprep.subr.mxu0 0.0
    %454 = vmatpush1.msra.mxu0 0.0
    %455 = vmatprep.subr.mxu0 0.0
    %456 = vmatpush1.msra.mxu0 0.0
    %457 = vmatprep.subr.mxu0 0.0
    %458 = vmatpush1.msra.mxu0 0.0
    %459 = vmatprep.subr.mxu0 0.0
    %460 = vmatpush1.msra.mxu0 0.0
    %461 = vmatprep.subr.mxu0 0.0
    %462 = vmatpush1.msra.mxu0 0.0
    %463 = vmatprep.mubr.f32.mxu0 0.0
    %v464 = vand.u32 %v91, 4294901760
    %v465 = vsub.f32 %v91, %v464
    %466 = vmatmul.mubr.f32.gmra.mrb[0].mxu0 %v465
    %v467 = vpop.f32.mrb[0].mxu0
    %v468 = vadd.f32 %v358, %v467
    %v469 = vpop.f32.mrb[0].mxu0
    %470 = vmatprep.mubr.f32.mxu0 0.0
    %v471 = vand.u32 %v92, 4294901760
    %v472 = vsub.f32 %v92, %v471
    %473 = vmatmul.mubr.f32.gmra.mrb[0].mxu0 %v472
    %v474 = vpop.f32.mrb[0].mxu0
    %v475 = vadd.f32 %v364, %v474
    %v476 = vpop.f32.mrb[0].mxu0
    %477 = vdwg.mxu0
    %478 = vmatprep.subr.mxu0 0.0
    %v479 = vand.u32 %v93, 4294901760
    %480 = vmatpush1.msra.mxu0 %v479
    %481 = vmatprep.subr.mxu0 0.0
    %v482 = vand.u32 %v94, 4294901760
    %483 = vmatpush1.msra.mxu0 %v482
    %484 = vmatprep.subr.mxu0 0.0
    %v485 = vand.u32 %v95, 4294901760
    %486 = vmatpush1.msra.mxu0 %v485
    %487 = vmatprep.subr.mxu0 0.0
    %v488 = vand.u32 %v96, 4294901760
    %489 = vmatpush1.msra.mxu0 %v488
    %490 = vmatprep.subr.mxu0 0.0
    %v491 = vand.u32 %v97, 4294901760
    %492 = vmatpush1.msra.mxu0 %v491
    %493 = vmatprep.subr.mxu0 0.0
    %v494 = vand.u32 %v98, 4294901760
    %495 = vmatpush1.msra.mxu0 %v494
    %496 = vmatprep.subr.mxu0 0.0
    %v497 = vand.u32 %v99, 4294901760
    %498 = vmatpush1.msra.mxu0 %v497
    %499 = vmatprep.subr.mxu0 0.0
    %v500 = vand.u32 %v100, 4294901760
    %501 = vmatpush1.msra.mxu0 %v500
    %502 = vmatprep.subr.mxu0 0.0
    %v503 = vand.u32 %v101, 4294901760
    %504 = vmatpush1.msra.mxu0 %v503
    %505 = vmatprep.subr.mxu0 0.0
    %v506 = vand.u32 %v102, 4294901760
    %507 = vmatpush1.msra.mxu0 %v506
    %508 = vmatprep.subr.mxu0 0.0
    %v509 = vand.u32 %v103, 4294901760
    %510 = vmatpush1.msra.mxu0 %v509
    %511 = vmatprep.subr.mxu0 0.0
    %v512 = vand.u32 %v104, 4294901760
    %513 = vmatpush1.msra.mxu0 %v512
    %514 = vmatprep.subr.mxu0 0.0
    %v515 = vand.u32 %v105, 4294901760
    %516 = vmatpush1.msra.mxu0 %v515
    %517 = vmatprep.subr.mxu0 0.0
    %v518 = vand.u32 %v106, 4294901760
    %519 = vmatpush1.msra.mxu0 %v518
    %520 = vmatprep.subr.mxu0 0.0
    %v521 = vand.u32 %v107, 4294901760
    %522 = vmatpush1.msra.mxu0 %v521
    %523 = vmatprep.subr.mxu0 0.0
    %v524 = vand.u32 %v108, 4294901760
    %525 = vmatpush1.msra.mxu0 %v524
    %526 = vmatprep.subr.mxu0 0.0
    %527 = vmatpush1.msra.mxu0 0.0
    %528 = vmatprep.subr.mxu0 0.0
    %529 = vmatpush1.msra.mxu0 0.0
    %530 = vmatprep.subr.mxu0 0.0
    %531 = vmatpush1.msra.mxu0 0.0
    %532 = vmatprep.subr.mxu0 0.0
    %533 = vmatpush1.msra.mxu0 0.0
    %534 = vmatprep.subr.mxu0 0.0
    %535 = vmatpush1.msra.mxu0 0.0
    %536 = vmatprep.subr.mxu0 0.0
    %537 = vmatpush1.msra.mxu0 0.0
    %538 = vmatprep.subr.mxu0 0.0
    %539 = vmatpush1.msra.mxu0 0.0
    %540 = vmatprep.subr.mxu0 0.0
    %541 = vmatpush1.msra.mxu0 0.0
    %542 = vmatprep.subr.mxu0 0.0
    %543 = vmatpush1.msra.mxu0 0.0
    %544 = vmatprep.subr.mxu0 0.0
    %545 = vmatpush1.msra.mxu0 0.0
    %546 = vmatprep.subr.mxu0 0.0
    %547 = vmatpush1.msra.mxu0 0.0
    %548 = vmatprep.subr.mxu0 0.0
    %549 = vmatpush1.msra.mxu0 0.0
    %550 = vmatprep.subr.mxu0 0.0
    %551 = vmatpush1.msra.mxu0 0.0
    %552 = vmatprep.subr.mxu0 0.0
    %553 = vmatpush1.msra.mxu0 0.0
    %554 = vmatprep.subr.mxu0 0.0
    %555 = vmatpush1.msra.mxu0 0.0
    %556 = vmatprep.subr.mxu0 0.0
    %557 = vmatpush1.msra.mxu0 0.0
    %558 = vmatprep.mubr.f32.mxu0 0.0
    %v559 = vand.u32 %v91, 4294901760
    %v560 = vsub.f32 %v91, %v559
    %v561 = vand.u32 %v560, 4294901760
    %562 = vmatmul.mubr.f32.gmra.mrb[0].mxu0 %v561
    %v563 = vpop.f32.mrb[0].mxu0
    %v564 = vadd.f32 %v468, %v563
    %v565 = vpop.f32.mrb[0].mxu0
    %566 = vmatprep.mubr.f32.mxu0 0.0
    %v567 = vand.u32 %v92, 4294901760
    %v568 = vsub.f32 %v92, %v567
    %v569 = vand.u32 %v568, 4294901760
    %570 = vmatmul.mubr.f32.gmra.mrb[0].mxu0 %v569
    %v571 = vpop.f32.mrb[0].mxu0
    %v572 = vadd.f32 %v475, %v571
    %v573 = vpop.f32.mrb[0].mxu0
    %574 = vdwg.mxu0
    %575 = vmatprep.subr.mxu0 0.0
    %v576 = vand.u32 %v93, 4294901760
    %v577 = vsub.f32 %v93, %v576
    %v578 = vand.u32 %v577, 4294901760
    %579 = vmatpush1.msra.mxu0 %v578
    %580 = vmatprep.subr.mxu0 0.0
    %v581 = vand.u32 %v94, 4294901760
    %v582 = vsub.f32 %v94, %v581
    %v583 = vand.u32 %v582, 4294901760
    %584 = vmatpush1.msra.mxu0 %v583
    %585 = vmatprep.subr.mxu0 0.0
    %v586 = vand.u32 %v95, 4294901760
    %v587 = vsub.f32 %v95, %v586
    %v588 = vand.u32 %v587, 4294901760
    %589 = vmatpush1.msra.mxu0 %v588
    %590 = vmatprep.subr.mxu0 0.0
    %v591 = vand.u32 %v96, 4294901760
    %v592 = vsub.f32 %v96, %v591
    %v593 = vand.u32 %v592, 4294901760
    %594 = vmatpush1.msra.mxu0 %v593
    %595 = vmatprep.subr.mxu0 0.0
    %v596 = vand.u32 %v97, 4294901760
    %v597 = vsub.f32 %v97, %v596
    %v598 = vand.u32 %v597, 4294901760
    %599 = vmatpush1.msra.mxu0 %v598
    %600 = vmatprep.subr.mxu0 0.0
    %v601 = vand.u32 %v98, 4294901760
    %v602 = vsub.f32 %v98, %v601
    %v603 = vand.u32 %v602, 4294901760
    %604 = vmatpush1.msra.mxu0 %v603
    %605 = vmatprep.subr.mxu0 0.0
    %v606 = vand.u32 %v99, 4294901760
    %v607 = vsub.f32 %v99, %v606
    %v608 = vand.u32 %v607, 4294901760
    %609 = vmatpush1.msra.mxu0 %v608
    %610 = vmatprep.subr.mxu0 0.0
    %v611 = vand.u32 %v100, 4294901760
    %v612 = vsub.f32 %v100, %v611
    %v613 = vand.u32 %v612, 4294901760
    %614 = vmatpush1.msra.mxu0 %v613
    %615 = vmatprep.subr.mxu0 0.0
    %v616 = vand.u32 %v101, 4294901760
    %v617 = vsub.f32 %v101, %v616
    %v618 = vand.u32 %v617, 4294901760
    %619 = vmatpush1.msra.mxu0 %v618
    %620 = vmatprep.subr.mxu0 0.0
    %v621 = vand.u32 %v102, 4294901760
    %v622 = vsub.f32 %v102, %v621
    %v623 = vand.u32 %v622, 4294901760
    %624 = vmatpush1.msra.mxu0 %v623
    %625 = vmatprep.subr.mxu0 0.0
    %v626 = vand.u32 %v103, 4294901760
    %v627 = vsub.f32 %v103, %v626
    %v628 = vand.u32 %v627, 4294901760
    %629 = vmatpush1.msra.mxu0 %v628
    %630 = vmatprep.subr.mxu0 0.0
    %v631 = vand.u32 %v104, 4294901760
    %v632 = vsub.f32 %v104, %v631
    %v633 = vand.u32 %v632, 4294901760
    %634 = vmatpush1.msra.mxu0 %v633
    %635 = vmatprep.subr.mxu0 0.0
    %v636 = vand.u32 %v105, 4294901760
    %v637 = vsub.f32 %v105, %v636
    %v638 = vand.u32 %v637, 4294901760
    %639 = vmatpush1.msra.mxu0 %v638
    %640 = vmatprep.subr.mxu0 0.0
    %v641 = vand.u32 %v106, 4294901760
    %v642 = vsub.f32 %v106, %v641
    %v643 = vand.u32 %v642, 4294901760
    %644 = vmatpush1.msra.mxu0 %v643
    %645 = vmatprep.subr.mxu0 0.0
    %v646 = vand.u32 %v107, 4294901760
    %v647 = vsub.f32 %v107, %v646
    %v648 = vand.u32 %v647, 4294901760
    %649 = vmatpush1.msra.mxu0 %v648
    %650 = vmatprep.subr.mxu0 0.0
    %v651 = vand.u32 %v108, 4294901760
    %v652 = vsub.f32 %v108, %v651
    %v653 = vand.u32 %v652, 4294901760
    %654 = vmatpush1.msra.mxu0 %v653
    %655 = vmatprep.subr.mxu0 0.0
    %656 = vmatpush1.msra.mxu0 0.0
    %657 = vmatprep.subr.mxu0 0.0
    %658 = vmatpush1.msra.mxu0 0.0
    %659 = vmatprep.subr.mxu0 0.0
    %660 = vmatpush1.msra.mxu0 0.0
    %661 = vmatprep.subr.mxu0 0.0
    %662 = vmatpush1.msra.mxu0 0.0
    %663 = vmatprep.subr.mxu0 0.0
    %664 = vmatpush1.msra.mxu0 0.0
    %665 = vmatprep.subr.mxu0 0.0
    %666 = vmatpush1.msra.mxu0 0.0
    %667 = vmatprep.subr.mxu0 0.0
    %668 = vmatpush1.msra.mxu0 0.0
    %669 = vmatprep.subr.mxu0 0.0
    %670 = vmatpush1.msra.mxu0 0.0
    %671 = vmatprep.subr.mxu0 0.0
    %672 = vmatpush1.msra.mxu0 0.0
    %673 = vmatprep.subr.mxu0 0.0
    %674 = vmatpush1.msra.mxu0 0.0
    %675 = vmatprep.subr.mxu0 0.0
    %676 = vmatpush1.msra.mxu0 0.0
    %677 = vmatprep.subr.mxu0 0.0
    %678 = vmatpush1.msra.mxu0 0.0
    %679 = vmatprep.subr.mxu0 0.0
    %680 = vmatpush1.msra.mxu0 0.0
    %681 = vmatprep.subr.mxu0 0.0
    %682 = vmatpush1.msra.mxu0 0.0
    %683 = vmatprep.subr.mxu0 0.0
    %684 = vmatpush1.msra.mxu0 0.0
    %685 = vmatprep.subr.mxu0 0.0
    %686 = vmatpush1.msra.mxu0 0.0
    %687 = vmatprep.mubr.f32.mxu0 0.0
    %v688 = vand.u32 %v91, 4294901760
    %689 = vmatmul.mubr.f32.gmra.mrb[0].mxu0 %v688
    %v690 = vpop.f32.mrb[0].mxu0
    %v691 = vadd.f32 %v564, %v690
    %v692 = vpop.f32.mrb[0].mxu0
    %693 = vmatprep.mubr.f32.mxu0 0.0
    %v694 = vand.u32 %v92, 4294901760
    %695 = vmatmul.mubr.f32.gmra.mrb[0].mxu0 %v694
    %v696 = vpop.f32.mrb[0].mxu0
    %v697 = vadd.f32 %v572, %v696
    %v698 = vpop.f32.mrb[0].mxu0
    %699 = vdwg.mxu0
    %700 = vmatprep.subr.mxu0 0.0
    %v701 = vand.u32 %v93, 4294901760
    %702 = vmatpush1.msra.mxu0 %v701
    %703 = vmatprep.subr.mxu0 0.0
    %v704 = vand.u32 %v94, 4294901760
    %705 = vmatpush1.msra.mxu0 %v704
    %706 = vmatprep.subr.mxu0 0.0
    %v707 = vand.u32 %v95, 4294901760
    %708 = vmatpush1.msra.mxu0 %v707
    %709 = vmatprep.subr.mxu0 0.0
    %v710 = vand.u32 %v96, 4294901760
    %711 = vmatpush1.msra.mxu0 %v710
    %712 = vmatprep.subr.mxu0 0.0
    %v713 = vand.u32 %v97, 4294901760
    %714 = vmatpush1.msra.mxu0 %v713
    %715 = vmatprep.subr.mxu0 0.0
    %v716 = vand.u32 %v98, 4294901760
    %717 = vmatpush1.msra.mxu0 %v716
    %718 = vmatprep.subr.mxu0 0.0
    %v719 = vand.u32 %v99, 4294901760
    %720 = vmatpush1.msra.mxu0 %v719
    %721 = vmatprep.subr.mxu0 0.0
    %v722 = vand.u32 %v100, 4294901760
    %723 = vmatpush1.msra.mxu0 %v722
    %724 = vmatprep.subr.mxu0 0.0
    %v725 = vand.u32 %v101, 4294901760
    %726 = vmatpush1.msra.mxu0 %v725
    %727 = vmatprep.subr.mxu0 0.0
    %v728 = vand.u32 %v102, 4294901760
    %729 = vmatpush1.msra.mxu0 %v728
    %730 = vmatprep.subr.mxu0 0.0
    %v731 = vand.u32 %v103, 4294901760
    %732 = vmatpush1.msra.mxu0 %v731
    %733 = vmatprep.subr.mxu0 0.0
    %v734 = vand.u32 %v104, 4294901760
    %735 = vmatpush1.msra.mxu0 %v734
    %736 = vmatprep.subr.mxu0 0.0
    %v737 = vand.u32 %v105, 4294901760
    %738 = vmatpush1.msra.mxu0 %v737
    %739 = vmatprep.subr.mxu0 0.0
    %v740 = vand.u32 %v106, 4294901760
    %741 = vmatpush1.msra.mxu0 %v740
    %742 = vmatprep.subr.mxu0 0.0
    %v743 = vand.u32 %v107, 4294901760
    %744 = vmatpush1.msra.mxu0 %v743
    %745 = vmatprep.subr.mxu0 0.0
    %v746 = vand.u32 %v108, 4294901760
    %747 = vmatpush1.msra.mxu0 %v746
    %748 = vmatprep.subr.mxu0 0.0
    %749 = vmatpush1.msra.mxu0 0.0
    %750 = vmatprep.subr.mxu0 0.0
    %751 = vmatpush1.msra.mxu0 0.0
    %752 = vmatprep.subr.mxu0 0.0
    %753 = vmatpush1.msra.mxu0 0.0
    %754 = vmatprep.subr.mxu0 0.0
    %755 = vmatpush1.msra.mxu0 0.0
    %756 = vmatprep.subr.mxu0 0.0
    %757 = vmatpush1.msra.mxu0 0.0
    %758 = vmatprep.subr.mxu0 0.0
    %759 = vmatpush1.msra.mxu0 0.0
    %760 = vmatprep.subr.mxu0 0.0
    %761 = vmatpush1.msra.mxu0 0.0
    %762 = vmatprep.subr.mxu0 0.0
    %763 = vmatpush1.msra.mxu0 0.0
    %764 = vmatprep.subr.mxu0 0.0
    %765 = vmatpush1.msra.mxu0 0.0
    %766 = vmatprep.subr.mxu0 0.0
    %767 = vmatpush1.msra.mxu0 0.0
    %768 = vmatprep.subr.mxu0 0.0
    %769 = vmatpush1.msra.mxu0 0.0
    %770 = vmatprep.subr.mxu0 0.0
    %771 = vmatpush1.msra.mxu0 0.0
    %772 = vmatprep.subr.mxu0 0.0
    %773 = vmatpush1.msra.mxu0 0.0
    %774 = vmatprep.subr.mxu0 0.0
    %775 = vmatpush1.msra.mxu0 0.0
    %776 = vmatprep.subr.mxu0 0.0
    %777 = vmatpush1.msra.mxu0 0.0
    %778 = vmatprep.subr.mxu0 0.0
    %779 = vmatpush1.msra.mxu0 0.0
    %780 = vmatprep.mubr.f32.mxu0 0.0
    %v781 = vand.u32 %v91, 4294901760
    %782 = vmatmul.mubr.f32.gmra.mrb[0].mxu0 %v781
    %v783 = vpop.f32.mrb[0].mxu0
    %v784 = vadd.f32 %v691, %v783
    %v785 = vpop.f32.mrb[0].mxu0
    %786 = vmatprep.mubr.f32.mxu0 0.0
    %v787 = vand.u32 %v92, 4294901760
    %788 = vmatmul.mubr.f32.gmra.mrb[0].mxu0 %v787
    %v789 = vpop.f32.mrb[0].mxu0
    %v790 = vadd.f32 %v697, %v789
    %v791 = vpop.f32.mrb[0].mxu0
    %792 = vdwg.mxu0
    %v793 = vrsqrt.pop %v784
    %v794 = vmul.f32 %v784, %v793
    %vm795 = vcmp.eq.f32.partialorder %v784, inf
    %v796 = vsel %vm795, %v784, %v794
    %vm797 = vcmp.eq.f32.partialorder %v784, 0.0
    %v798 = vand.u32 %v784, 2147483648
    %v799 = vsel %vm797, %v798, %v796
    %v800 = vrsqrt.pop %v790
    %v801 = vmul.f32 %v790, %v800
    %vm802 = vcmp.eq.f32.partialorder %v790, inf
    %v803 = vsel %vm802, %v790, %v801
    %vm804 = vcmp.eq.f32.partialorder %v790, 0.0
    %v805 = vand.u32 %v790, 2147483648
    %v806 = vsel %vm804, %v805, %v803
    %s807 = sadd.s32 0, 0
    %s808 = sadd.s32 %s807, 1
    %s809 = smul.u32 %s808, 16
    %p810 = scmp.le.s32.totalorder %s809, 16
    // Predicated region
    $region18: #{tpu_custom_call.1} parent=1 // pred_check
      %p811 = pneg %p810
    $region19: #{tpu_custom_call.1} parent=1 // pred_check_branch
      %813 = sbr.rel (%p811) target = $region21
    $region20: #{tpu_custom_call.1} parent=1 // pred_region
      %v814 = vld [vmem:[#allocation2] sm:$0x1]
      %vm815 = vcmask 64512
      %v816 = vsel %vm815, %v799, 0.0
      %v817 = vsel %vm815, %v806, 0.0
      %v818 = vadd.f32 %v816, %v817
      %v819 = vrot.slane %v818, 4
      %v820 = vadd.f32 %v818, %v819
      %v821 = vrot.slane %v820, 2
      %v822 = vadd.f32 %v820, %v821
      %v823 = vrot.slane %v822, 1
      %v824 = vadd.f32 %v822, %v823
      %v825 = vadd.f32 %v814, %v824
      %vm826 = vcmask 57344
      %827 = vst.msk [vmem:[#allocation2] sm:$0x1] %vm826, %v825
    $region21: #{tpu_custom_call.1} parent=1 // pred_fallthru
      _
    %p828 = scmp.gt.s32.totalorder %s809, 16
    // Predicated region
    $region22: #{tpu_custom_call.1} parent=1 // pred_check
      %p829 = pneg %p828
    $region23: #{tpu_custom_call.1} parent=1 // pred_check_branch
      %831 = sbr.rel (%p829) target = $region25
    $region24: #{tpu_custom_call.1} parent=1 // pred_region
      %s832 = smul.u32 %s807, 16
      %v833 = vlaneseq
      %v834 = vshrl.u32 %v833, 7
      %v835 = vadd.s32 %v834, 8
      %v836 = vstv %s832
      %v837 = vadd.s32 %v836, %v834
      %v838 = vadd.s32 %v836, %v835
      %vm839 = vcmp.lt.s32.totalorder %v837, 16
      %vm840 = vcmp.lt.s32.totalorder %v838, 16
      %v841 = vsel %vm839, %v799, 0.0
      %v842 = vsel %vm840, %v806, 0.0
      %v843 = vld [vmem:[#allocation2] sm:$0x1]
      %vm844 = vcmask 64512
      %v845 = vsel %vm844, %v841, 0.0
      %v846 = vsel %vm844, %v842, 0.0
      %v847 = vadd.f32 %v845, %v846
      %v848 = vrot.slane %v847, 4
      %v849 = vadd.f32 %v847, %v848
      %v850 = vrot.slane %v849, 2
      %v851 = vadd.f32 %v849, %v850
      %v852 = vrot.slane %v851, 1
      %v853 = vadd.f32 %v851, %v852
      %v854 = vadd.f32 %v843, %v853
      %vm855 = vcmask 57344
      %856 = vst.msk [vmem:[#allocation2] sm:$0x1] %vm855, %v854
    $region25: #{tpu_custom_call.1} parent=1 // pred_fallthru
      _
    // Predicated region
    $region26: #{tpu_custom_call.1} parent=1 // pred_check
      %p857 = pneg %p79
    $region27: #{tpu_custom_call.1} parent=1 // pred_check_branch
      %859 = sbr.rel (%p857) target = $region29
    $region28: #{tpu_custom_call.1} parent=1 // pred_region
      %v860 = vld [vmem:[#allocation2] sm:$0x1]
      %vm861 = vcmask 57344
      %v862 = vsel %vm861, %v860, 0.0
      %863 = vadd.xlane.f32.xlu0 %v862
      %v864 = vpop.xlane.xlu0 %863
      %v865 = vrot.slane %v864, 4
      %v866 = vadd.f32 %v864, %v865
      %v867 = vrot.slane %v866, 2
      %v868 = vadd.f32 %v866, %v867
      %v869 = vrot.slane %v868, 1
      %v870 = vadd.f32 %v868, %v869
      %s871 = vtos %v870
      %v872 = vstv %s871
      %v873 = vadd.f32 %v872, 0.0
      %874 = vst [vmem:[#allocation3] sm:$0xff] %v873
    $region29: #{tpu_custom_call.1} parent=1 // pred_fallthru
      _
    // Predicated region
    $region30: #{tpu_custom_call.1} parent=1 // pred_check
      _
    $region31: #{tpu_custom_call.1} parent=1 // pred_check_branch
      %876 = sbr.rel (0) target = $region33
    $region32: #{tpu_custom_call.1} parent=1 // pred_region
      %s878 = ssub.s32 128, 128
      %879 = vsyncadd [#allocation4], %s878
      %s881 = sshll.u32 [#allocation3], 4
      %s882 = int_to_ptr.vmem [resolvable:$true] %s881
      %884 = dma.vmem_to_hbm [thread:$0]  %s882, 128, %s3, [#allocation4]
    $region33: #{tpu_custom_call.1} parent=1 // pred_fallthru
      _
    // Predicated region
    $region34: #{tpu_custom_call.1} parent=1 // pred_check
      _
    $region35: #{tpu_custom_call.1} parent=1 // pred_check_branch
      %886 = sbr.rel (0) target = $region37
    $region36: #{tpu_custom_call.1} parent=1 // pred_region
      %887 = dma.done [#allocation4], 128
    $region37: #{tpu_custom_call.1} parent=1 // pred_fallthru
      _
    %888 = vsyncpa [#allocation4], 1

</llo_original>
